<compile_context>
chip_gen: v6e
topology: v6e:2x2x1
jax: 0.10.0
libtpu: 0.0.40
codegen_flags: <defaults>
</compile_context>

<pallas_src>
import jax
import jax.numpy as jnp
from jax import lax
from jax.experimental import pallas as pl
from jax.experimental.pallas import tpu as pltpu


def _round_up(x, m):
    return (x + m - 1) // m * m


def _embed_dropout_kernel(idx_ref, table_ref, mask_ref, out_ref):
    """One batch block: gather rows + apply pre-scaled inverted-dropout mask.

    idx_ref  : (BLOCK_B, 1) int32   — token ids for this block
    table_ref: (V, H) float32       — full embedding table (VMEM-resident)
    mask_ref : (BLOCK_B, H) float32 — keep mask, already scaled by 1/(1-p)
    out_ref  : (BLOCK_B, H) float32
    """
    block_b = idx_ref.shape[0]
    v = table_ref.shape[0]
    idx = idx_ref[...]                                          # (BLOCK_B, 1)
    col = lax.broadcasted_iota(jnp.int32, (block_b, v), 1)      # (BLOCK_B, V)
    onehot = (col == idx).astype(table_ref.dtype)               # exact 0/1
    rows = jnp.dot(onehot, table_ref[...],
                   preferred_element_type=jnp.float32)          # (BLOCK_B, H)
    out_ref[...] = (rows * mask_ref[...]).astype(out_ref.dtype)


def _embed_kernel(idx_ref, table_ref, out_ref):
    """Eval-mode variant: dropout is the identity, just gather rows."""
    block_b = idx_ref.shape[0]
    v = table_ref.shape[0]
    idx = idx_ref[...]
    col = lax.broadcasted_iota(jnp.int32, (block_b, v), 1)
    onehot = (col == idx).astype(table_ref.dtype)
    rows = jnp.dot(onehot, table_ref[...], preferred_element_type=jnp.float32)
    out_ref[...] = rows.astype(out_ref.dtype)


def embedding_dropout(indices, emb_table, key, *, p=0.5, training=True,
                      block_b=256):
    """indices: (B,) int32, emb_table: (V, H) float32 -> (B, H) float32."""
    (B,) = indices.shape
    V, H = emb_table.shape

    # Batch block: multiple of 8 (sublane-dense), capped at `block_b`.
    bb = min(_round_up(block_b, 8), _round_up(B, 8))
    B_pad = _round_up(B, bb)
    n_blocks = B_pad // bb

    # Indices as a (B_pad, 1) int32 column so the block (bb, 1) is legal
    # (second-to-last dim multiple of 8, last dim equals full dim).
    idx2d = jnp.zeros((B_pad, 1), jnp.int32).at[:B, 0].set(
        indices.astype(jnp.int32))

    in_specs = [
        pl.BlockSpec((bb, 1), lambda i: (i, 0)),     # per-block indices
        pl.BlockSpec((V, H), lambda i: (0, 0)),      # table resident across grid
    ]
    args = [idx2d, emb_table]

    apply_dropout = training and p > 0.0
    if apply_dropout:
        keep_prob = 1.0 - p
        if keep_prob > 0.0:
            keep = jax.random.bernoulli(key, keep_prob, (B_pad, H))
            mask = keep.astype(jnp.float32) * jnp.float32(1.0 / keep_prob)
        else:
            # p == 1.0: everything dropped (matches torch.nn.Dropout(1.0)).
            mask = jnp.zeros((B_pad, H), jnp.float32)
        in_specs.append(pl.BlockSpec((bb, H), lambda i: (i, 0)))
        args.append(mask)
        kernel = _embed_dropout_kernel
    else:
        kernel = _embed_kernel

    out = pl.pallas_call(
        kernel,
        grid=(n_blocks,),
        in_specs=in_specs,
        out_specs=pl.BlockSpec((bb, H), lambda i: (i, 0)),
        out_shape=jax.ShapeDtypeStruct((B_pad, H), jnp.float32),
        compiler_params=pltpu.CompilerParams(
            dimension_semantics=("parallel",)),
    )(*args)
    return out[:B]


if __name__ == "__main__":
    key = jax.random.PRNGKey(0)
    k_emb, k_idx, k_drop = jax.random.split(key, 3)

    vocab_size = 16     # len(self.embedding_map)
    hidden = 128        # self.hidden_size (embedding dim)
    batch = 8           # words per batch

    emb_table = jax.random.normal(k_emb, (vocab_size, hidden), dtype=jnp.float32)
    indices = jax.random.randint(k_idx, (batch,), 0, vocab_size, dtype=jnp.int32)

    ref = jnp.take(emb_table, indices, axis=0)

    # Eval-mode pass (dropout = identity): must match a pure-JAX gather.
    out_eval = jax.block_until_ready(
        embedding_dropout(indices, emb_table, k_drop, p=0.5, training=False))
    assert out_eval.shape == (batch, hidden)
    assert jnp.allclose(out_eval, ref, atol=1e-6), "embedding gather mismatch"

    # Train-mode pass (inverted dropout): surviving elements == 2 * value,
    # dropped elements == 0.
    out_train = jax.block_until_ready(
        embedding_dropout(indices, emb_table, k_drop, p=0.5, training=True))
    kept = out_train != 0.0
    assert jnp.allclose(
        jnp.where(kept, out_train, 0.0),
        jnp.where(kept, 2.0 * ref, 0.0),
        atol=1e-5,
    ), "dropout scaling mismatch"

    print("KERNEL_OK")
</pallas_src>

<mosaic_0001>
module attributes {stable_mosaic.version = 11 : i64} {
  func.func @_embed_kernel(%arg0: i32, %arg1: memref<8x1xi32, #tpu.memory_space<vmem>>, %arg2: memref<16x128xf32, #tpu.memory_space<vmem>>, %arg3: memref<8x128xf32, #tpu.memory_space<vmem>>) attributes {dimension_semantics = [#tpu.dimension_semantics<parallel>], iteration_bounds = array<i64: 1>, scalar_prefetch = 0 : i64, scratch_operands = 0 : i64, tpu.core_type = #tpu.core_type<tc>, window_params = [{transform_indices = @transform_0, window_bounds = array<i64: 8, 1>}, {pipeline_mode = #tpu.pipeline_mode<synchronous>, transform_indices = @transform_1, window_bounds = array<i64: 16, 128>}, {transform_indices = @transform_2, window_bounds = array<i64: 8, 128>}]} {
    %c0 = arith.constant 0 : index
    %c0_0 = arith.constant 0 : index
    %0 = vector.load %arg1[%c0, %c0_0] : memref<8x1xi32, #tpu.memory_space<vmem>>, vector<8x1xi32>
    %1 = tpu.iota {dimensions = array<i32: 1>} : vector<8x16xi32>
    %2 = vector.broadcast %0 : vector<8x1xi32> to vector<8x16xi32>
    %3 = arith.cmpi eq, %1, %2 : vector<8x16xi32>
    %4 = arith.extui %3 : vector<8x16xi1> to vector<8x16xi32>
    %5 = arith.sitofp %4 : vector<8x16xi32> to vector<8x16xf32>
    %c0_1 = arith.constant 0 : index
    %c0_2 = arith.constant 0 : index
    %6 = vector.load %arg2[%c0_1, %c0_2] : memref<16x128xf32, #tpu.memory_space<vmem>>, vector<16x128xf32>
    %cst = arith.constant dense<0.000000e+00> : vector<8x128xf32>
    %7 = tpu.matmul %5, %6, %cst {dimension_numbers = #tpu.dot_dimension_numbers<[1], [0], [0], [1], [0, 0, 1, 1], [], []>} : vector<8x16xf32>, vector<16x128xf32>, vector<8x128xf32> -> vector<8x128xf32>
    %c0_3 = arith.constant 0 : index
    %c0_4 = arith.constant 0 : index
    %8 = vector.load %arg3[%c0_3, %c0_4] : memref<8x128xf32, #tpu.memory_space<vmem>>, vector<8x128xf32>
    tpu.vector_store %arg3[%c0_3, %c0_4], %7 {strides = array<i32>} : memref<8x128xf32, #tpu.memory_space<vmem>>, vector<8x128xf32>,
    return
  }
  func.func @transform_0(%arg0: i32) -> (i32, i32) {
    %c0_i32 = arith.constant 0 : i32
    %c0_i32_0 = arith.constant 0 : i32
    return %arg0, %c0_i32 : i32, i32
  }
  func.func @transform_1(%arg0: i32) -> (i32, i32) {
    %c0_i32 = arith.constant 0 : i32
    %c0_i32_0 = arith.constant 0 : i32
    %c0_i32_1 = arith.constant 0 : i32
    return %c0_i32, %c0_i32_0 : i32, i32
  }
  func.func @transform_2(%arg0: i32) -> (i32, i32) {
    %c0_i32 = arith.constant 0 : i32
    %c0_i32_0 = arith.constant 0 : i32
    return %arg0, %c0_i32 : i32, i32
  }
}

</mosaic_0001>

<llo_original>
// kernel: tpu_custom_call.1
$region0: #{tpu_custom_call.1}
  #allocation0 [shape = 'u32[]', space=smem, size = 0x4, offset = 0x4, fixed_abs, tag = 'smem constant byte address 0x4 - core index']
  #allocation1 [shape = 'u32[144,128]{1,0:T(1,128)}', space=vmem, size = 0x12000, scoped, tag = 'internal scratch']
  %s0 = inlined_call_operand.vmem [shape: s32[8,1], index: 0, kind: input, shape index: {}]
  %s1 = inlined_call_operand.hbm [shape: f32[16,128], index: 1, kind: input, shape index: {}]
  %s2 = inlined_call_operand.hbm [shape: f32[8,128], index: 2, kind: output, shape index: {}]
  %s3 = sld [smem:[#allocation0]]
  $region22: #{tpu_custom_call.1} parent=0
    _
  %s5 = ssub.s32 1, %s3
  %s6 = scalar_select 0, %s5, %s3
  $region1: #{tpu_custom_call.1} parent=0
    #allocation2 [shape = 'u8[8192]{0}', space=vmem, size = 0x2000, scoped, tag = 'input window, operand 1, single buffered']
    #allocation3 [shape = 's32[1]{0}', space=sflag, size = 0x4, scoped, tag = 'scoped memory for tpu_custom_call.1']
    #allocation4 [shape = 's32[1]{0}', space=sflag, size = 0x4, scoped, tag = 'scoped memory for tpu_custom_call.1']
    #allocation5 [shape = 'u8[4096]{0}', space=vmem, size = 0x1000, scoped, tag = 'output window, operand 0, single buffered']
    %7 = vsyncpa [#allocation3], 0
    %8 = vsyncpa [#allocation4], 0
    // Predicated region
    $region2: #{tpu_custom_call.1} parent=1 // pred_check
      _
    $region3: #{tpu_custom_call.1} parent=1 // pred_check_branch
      %10 = sbr.rel (0) target = $region5
    $region4: #{tpu_custom_call.1} parent=1 // pred_region
      _
    $region5: #{tpu_custom_call.1} parent=1 // pred_fallthru
      _
    // Predicated region
    $region6: #{tpu_custom_call.1} parent=1 // pred_check
      _
    $region7: #{tpu_custom_call.1} parent=1 // pred_check_branch
      %12 = sbr.rel (0) target = $region9
    $region8: #{tpu_custom_call.1} parent=1 // pred_region
      %s14 = ssub.s32 256, 256
      %15 = vsyncadd [#allocation3], %s14
      %s16 = sshll.u32 [#allocation2], 4
      %s17 = int_to_ptr.vmem [resolvable:$true] %s16
      %22 = dma.hbm_to_vmem [thread:$0]  %s1, 256, %s17, [#allocation3], 128, 128, 8
    $region9: #{tpu_custom_call.1} parent=1 // pred_fallthru
      _
    // Predicated region
    $region10: #{tpu_custom_call.1} parent=1 // pred_check
      _
    $region11: #{tpu_custom_call.1} parent=1 // pred_check_branch
      %24 = sbr.rel (0) target = $region13
    $region12: #{tpu_custom_call.1} parent=1 // pred_region
      %25 = dma.done [#allocation3], 256
    $region13: #{tpu_custom_call.1} parent=1 // pred_fallthru
      _
    %v26 = vld [vmem:[%s0] sm:$0xff]
    %v27 = vlaneseq
    %v28 = vand.u32 %v27, 127
    %29 = vset.pattern.permute.xlu0 0
    %30 = vperm.xlu0 %29, %v26
    %v31 = vpop.permute.xlu0 %30
    %vm32 = vcmp.eq.s32.totalorder %v28, %v31
    %v33 = vsel %vm32, 1, 0
    %v34 = vcvt.s32.f32 %v33
    %v35 = vld [vmem:[#allocation2] sm:$0xff]
    %v36 = vld [vmem:[#allocation2 + $0x8] sm:$0xff]
    %vm37 = vcmask 130048
    %v39 = vsel %vm37, %v34, 0
    %41 = vmatprep.subr.mxu0 0.0
    %42 = vmatpush1.msra.mxu0 0.0
    %43 = vmatprep.subr.mxu0 0.0
    %44 = vmatpush1.msra.mxu0 0.0
    %45 = vmatprep.subr.mxu0 0.0
    %46 = vmatpush1.msra.mxu0 0.0
    %47 = vmatprep.subr.mxu0 0.0
    %48 = vmatpush1.msra.mxu0 0.0
    %49 = vmatprep.subr.mxu0 0.0
    %50 = vmatpush1.msra.mxu0 0.0
    %51 = vmatprep.subr.mxu0 0.0
    %52 = vmatpush1.msra.mxu0 0.0
    %53 = vmatprep.subr.mxu0 0.0
    %54 = vmatpush1.msra.mxu0 0.0
    %55 = vmatprep.subr.mxu0 0.0
    %56 = vmatpush1.msra.mxu0 0.0
    %57 = vmatprep.subr.mxu0 0.0
    %58 = vmatpush1.msra.mxu0 0.0
    %59 = vmatprep.subr.mxu0 0.0
    %60 = vmatpush1.msra.mxu0 0.0
    %61 = vmatprep.subr.mxu0 0.0
    %62 = vmatpush1.msra.mxu0 0.0
    %63 = vmatprep.subr.mxu0 0.0
    %64 = vmatpush1.msra.mxu0 0.0
    %65 = vmatprep.subr.mxu0 0.0
    %66 = vmatpush1.msra.mxu0 0.0
    %67 = vmatprep.subr.mxu0 0.0
    %68 = vmatpush1.msra.mxu0 0.0
    %69 = vmatprep.subr.mxu0 0.0
    %70 = vmatpush1.msra.mxu0 %v36
    %71 = vmatprep.subr.mxu0 0.0
    %72 = vmatpush1.msra.mxu0 %v35
    %73 = vmatprep.subr.mxu0 0.0
    %74 = vmatpush2.msra.mxu0 0.0
    %75 = vmatprep.subr.mxu0 0.0
    %76 = vmatpush2.msra.mxu0 0.0
    %77 = vmatprep.subr.mxu0 0.0
    %78 = vmatpush2.msra.mxu0 0.0
    %79 = vmatprep.subr.mxu0 0.0
    %80 = vmatpush2.msra.mxu0 0.0
    %81 = vmatprep.subr.mxu0 0.0
    %82 = vmatpush2.msra.mxu0 0.0
    %83 = vmatprep.subr.mxu0 0.0
    %84 = vmatpush2.msra.mxu0 0.0
    %85 = vmatprep.subr.mxu0 0.0
    %86 = vmatpush2.msra.mxu0 0.0
    %87 = vmatprep.subr.mxu0 0.0
    %88 = vmatpush2.msra.mxu0 0.0
    %89 = vmatprep.subr.mxu0 0.0
    %90 = vmatpush2.msra.mxu0 0.0
    %91 = vmatprep.subr.mxu0 0.0
    %92 = vmatpush2.msra.mxu0 0.0
    %93 = vmatprep.subr.mxu0 0.0
    %94 = vmatpush2.msra.mxu0 0.0
    %95 = vmatprep.subr.mxu0 0.0
    %96 = vmatpush2.msra.mxu0 0.0
    %97 = vmatprep.subr.mxu0 0.0
    %98 = vmatpush2.msra.mxu0 0.0
    %99 = vmatprep.subr.mxu0 0.0
    %100 = vmatpush2.msra.mxu0 0.0
    %101 = vmatprep.subr.mxu0 0.0
    %102 = vmatpush2.msra.mxu0 0.0
    %103 = vmatprep.subr.mxu0 0.0
    %104 = vmatpush2.msra.mxu0 0.0
    %105 = vmatprep.mubr.f32.mxu0 0.0
    %106 = vmatmul.mubr.f32.gmra.mxu0 %v39
    %v107 = vpop.f32.mrf.mxu0
    %v108 = vadd.f32 0.0, %v107
    %v109 = vpop.f32.mrf.mxu0
    %110 = vdwg.mxu0
    %111 = vst [vmem:[#allocation5] sm:$0xff] %v108
    // Predicated region
    $region14: #{tpu_custom_call.1} parent=1 // pred_check
      _
    $region15: #{tpu_custom_call.1} parent=1 // pred_check_branch
      %113 = sbr.rel (0) target = $region17
    $region16: #{tpu_custom_call.1} parent=1 // pred_region
      %s115 = ssub.s32 128, 128
      %116 = vsyncadd [#allocation4], %s115
      %s118 = sshll.u32 [#allocation5], 4
      %s119 = int_to_ptr.vmem [resolvable:$true] %s118
      %121 = dma.vmem_to_hbm [thread:$0]  %s119, 128, %s2, [#allocation4]
    $region17: #{tpu_custom_call.1} parent=1 // pred_fallthru
      _
    // Predicated region
    $region18: #{tpu_custom_call.1} parent=1 // pred_check
      _
    $region19: #{tpu_custom_call.1} parent=1 // pred_check_branch
      %123 = sbr.rel (0) target = $region21
    $region20: #{tpu_custom_call.1} parent=1 // pred_region
      %124 = dma.done [#allocation4], 128
    $region21: #{tpu_custom_call.1} parent=1 // pred_fallthru
      _
    %125 = vsyncpa [#allocation3], 1
    %126 = vsyncpa [#allocation4], 1

</llo_original>
